<compile_context>
chip_gen: v7x
topology: tpu7x:2x2x1
jax: 0.10.0
libtpu: 0.0.40
codegen_flags: <defaults>
</compile_context>

<pallas_src>
import math
import functools

import jax
import jax.numpy as jnp
from jax import lax
from jax.experimental import pallas as pl
from jax.experimental.pallas import tpu as pltpu


_NEG_INF = -1e30  # large finite negative: safe masking, no inf-inf NaN risk


def _pick_tile(dim, target, align=1):
    """Largest block size <= target that evenly tiles `dim`.

    Prefers multiples of `align` (8 for a sublane axis, 128 for a lane axis) so
    blocks satisfy the TPU (8, 128) constraint; the full dim (always legal) is
    used when dim <= target or when no aligned divisor exists.
    """
    if dim <= target:
        return dim
    start = (target // align) * align
    for cand in range(start, 0, -align):
        if dim % cand == 0:
            return cand
    # TODO(synk): no aligned divisor <= target; full-dim block may be VMEM-heavy
    # on v7x for pathological shapes (pad+mask would be the robust fix).
    return dim


# ----------------------------------------------------------------------------
# Kernel 1: tiled linear  y = x @ W + b   (used for c_attn and c_proj)
# ----------------------------------------------------------------------------
def _linear_kernel(x_ref, w_ref, b_ref, o_ref, acc_ref):
    k = pl.program_id(2)

    @pl.when(k == 0)
    def _init():
        acc_ref[...] = jnp.zeros_like(acc_ref)

    acc_ref[...] += jnp.dot(x_ref[...], w_ref[...],
                            preferred_element_type=jnp.float32)

    @pl.when(k == pl.num_programs(2) - 1)
    def _finalize():
        out = acc_ref[...] + b_ref[...].astype(jnp.float32)  # bias fused here
        o_ref[...] = out.astype(o_ref.dtype)


def pallas_linear(x2d, w, b, *, tile_m=512, tile_n=768, tile_k=768):
    """x2d: (M, K)  w: (K, N)  b: (1, N)  ->  (M, N) with bias fused at finalize."""
    m, k = x2d.shape
    _, n = w.shape
    tm = _pick_tile(m, tile_m, align=8)     # sublane axis of x / out
    tn = _pick_tile(n, tile_n, align=128)   # lane axis of w / out
    tk = _pick_tile(k, tile_k, align=128)   # lane axis of x, sublane of w
    grid = (m // tm, n // tn, k // tk)

    cost = pl.CostEstimate(
        flops=2 * m * n * k,
        transcendentals=0,
        bytes_accessed=(m * k + k * n + m * n) * x2d.dtype.itemsize,
    )

    return pl.pallas_call(
        _linear_kernel,
        out_shape=jax.ShapeDtypeStruct((m, n), x2d.dtype),
        grid=grid,
        in_specs=[
            pl.BlockSpec((tm, tk), lambda i, j, kk: (i, kk)),
            pl.BlockSpec((tk, tn), lambda i, j, kk: (kk, j)),
            pl.BlockSpec((1, tn), lambda i, j, kk: (0, j)),
        ],
        out_specs=pl.BlockSpec((tm, tn), lambda i, j, kk: (i, j)),
        scratch_shapes=[pltpu.VMEM((tm, tn), jnp.float32)],
        compiler_params=pltpu.CompilerParams(
            dimension_semantics=("parallel", "parallel", "arbitrary")),
        cost_estimate=cost,
    )(x2d, w, b)


# ----------------------------------------------------------------------------
# Kernel 2: flash-attention style causal attention (online softmax, KV-tiled)
# ----------------------------------------------------------------------------
def _flash_attn_kernel(q_ref, k_ref, v_ref, o_ref, m_ref, l_ref, acc_ref,
                       *, block_q, block_k, scale):
    # q_ref: (bq, H, hd)  k_ref/v_ref: (bk, H, hd)  o_ref: (bq, H*hd)
    # scratch: m_ref/l_ref: (H, bq, 1) f32   acc_ref: (H, bq, hd) f32
    qi = pl.program_id(1)
    ki = pl.program_id(2)

    @pl.when(ki == 0)
    def _init():
        m_ref[...] = jnp.full_like(m_ref, _NEG_INF)
        l_ref[...] = jnp.zeros_like(l_ref)
        acc_ref[...] = jnp.zeros_like(acc_ref)

    @pl.when(ki <= qi)  # causal block skipping: upper-triangular blocks do nothing
    def _compute():
        q = q_ref[...]                      # (bq, H, hd), input dtype
        k = k_ref[...]                      # (bk, H, hd)
        v = v_ref[...]                      # (bk, H, hd)
        if scale != 1.0:                    # normally folded into c_attn weights
            q = q * jnp.asarray(scale, dtype=q.dtype)

        # Batched over heads (einsum 'qhd,khd->hqk'): one MXU call, no per-head
        # sublane slicing; f32 accumulation, no operand up-cast.
        s = lax.dot_general(q, k, (((2,), (2,)), ((1,), (1,))),
                            preferred_element_type=jnp.float32)   # (H, bq, bk)

        # Element-wise causal mask only matters on diagonal blocks (bq == bk);
        # off-diagonal (ki < qi) blocks are fully valid (scalar short-circuit).
        row_ids = lax.broadcasted_iota(jnp.int32, (block_q, block_k), 0)
        col_ids = lax.broadcasted_iota(jnp.int32, (block_q, block_k), 1)
        valid = jnp.logical_or(ki < qi, col_ids <= row_ids)       # (bq, bk)
        s = jnp.where(valid[None, :, :], s, _NEG_INF)

        # Online softmax update, whole-(H, bq, *) tensors (dense VPU ops).
        # TODO(synk): exp in bf16 would double EUP throughput on v6e/v7x
        # (attention inner loop is EUP-bound); kept f32 for accuracy / v5e.
        m_prev = m_ref[...]                                       # (H, bq, 1)
        m_new = jnp.maximum(m_prev, jnp.max(s, axis=-1, keepdims=True))
        alpha = jnp.exp(m_prev - m_new)
        p = jnp.exp(s - m_new)                                    # (H, bq, bk) f32
        l_ref[...] = alpha * l_ref[...] + jnp.sum(p, axis=-1, keepdims=True)
        # einsum 'hqk,khd->hqd' on the MXU, f32 accumulation.
        pv = lax.dot_general(p.astype(v.dtype), v, (((2,), (0,)), ((0,), (1,))),
                             preferred_element_type=jnp.float32)  # (H, bq, hd)
        acc_ref[...] = alpha * acc_ref[...] + pv
        m_ref[...] = m_new

    @pl.when(ki == pl.num_programs(2) - 1)
    def _finalize():
        inv_l = pl.reciprocal(l_ref[...], approx=False)   # once per q block
        out = acc_ref[...] * inv_l                        # (H, bq, hd) f32
        n_head = out.shape[0]
        # Lane-dense store: concatenate heads along lanes once and write a single
        # (bq, H*hd) block (the downstream (B, T, C) reshape is then a no-op).
        out = jnp.concatenate([out[h] for h in range(n_head)], axis=-1)
        o_ref[...] = out.astype(o_ref.dtype)


def pallas_flash_causal_attention(qkv, *, n_head, block_q=256, block_k=256,
                                  scale=1.0):
    """qkv: (B, T, 3, n_head, head_dim) from c_attn -> (B, T, n_head*head_dim)."""
    B, T, three, H, hd = qkv.shape
    assert three == 3 and H == n_head
    C = H * hd
    # Equal q/kv tiles keep the diagonal-block causal mask a simple col<=row.
    bt = _pick_tile(T, min(block_q, block_k), align=8)
    grid = (B, T // bt, T // bt)

    kern = functools.partial(_flash_attn_kernel, block_q=bt, block_k=bt,
                             scale=scale)

    # q/k/v are three views of the same (B, T, 3, H, hd) array: no wrapper
    # transposes/splits — BlockSpec index_maps pick the qkv slot and KV block.
    # K/V block indices are clamped at the diagonal so fully-masked steps reuse
    # the resident VMEM block and issue no HBM DMA.
    q_spec = pl.BlockSpec((None, bt, None, H, hd),
                          lambda b, qi, ki: (b, qi, 0, 0, 0))
    k_spec = pl.BlockSpec((None, bt, None, H, hd),
                          lambda b, qi, ki: (b, jnp.minimum(ki, qi), 1, 0, 0))
    v_spec = pl.BlockSpec((None, bt, None, H, hd),
                          lambda b, qi, ki: (b, jnp.minimum(ki, qi), 2, 0, 0))
    o_spec = pl.BlockSpec((None, bt, C), lambda b, qi, ki: (b, qi, 0))
    # TODO(synk): if K/V DMA efficiency shows up in profiles, emit a (3, B*T, C)
    # layout from c_attn so each K/V block DMA is a fully contiguous slab.

    cost = pl.CostEstimate(
        flops=4 * B * H * T * T * hd,          # QK^T + PV, non-causal upper bound
        transcendentals=B * H * T * T,
        bytes_accessed=(qkv.size + B * T * C) * qkv.dtype.itemsize,
    )

    return pl.pallas_call(
        kern,
        out_shape=jax.ShapeDtypeStruct((B, T, C), qkv.dtype),
        grid=grid,
        in_specs=[q_spec, k_spec, v_spec],
        out_specs=o_spec,
        scratch_shapes=[
            pltpu.VMEM((H, bt, 1), jnp.float32),   # running max m
            pltpu.VMEM((H, bt, 1), jnp.float32),   # running sum l
            pltpu.VMEM((H, bt, hd), jnp.float32),  # output accumulator
        ],
        compiler_params=pltpu.CompilerParams(
            dimension_semantics=("parallel", "parallel", "arbitrary")),
        cost_estimate=cost,
    )(qkv, qkv, qkv)


# ----------------------------------------------------------------------------
# Module wrapper: CausalSelfAttention forward pass
# ----------------------------------------------------------------------------
def causal_self_attention(x, params, n_head, *, block_q=256, block_k=256):
    """x: (B, T, C). params: dict of c_attn/c_proj weights & biases ((in, out) layout)."""
    B, T, C = x.shape
    hd = C // n_head
    scale = 1.0 / math.sqrt(hd)

    # Fold the softmax scale into the q columns of c_attn weight & bias: removes
    # the per-KV-block scaling from the attention kernel entirely.
    col_scale = jnp.concatenate(
        [jnp.full((C,), scale, dtype=params["w_attn"].dtype),
         jnp.ones((2 * C,), dtype=params["w_attn"].dtype)])
    w_attn = params["w_attn"] * col_scale[None, :]
    b_attn = params["b_attn"] * col_scale[None, :]

    # c_attn: tiled matmul with fused bias.
    x2d = x.reshape(B * T, C)
    qkv = pallas_linear(x2d, w_attn, b_attn)              # (B*T, 3C)
    # Free (contiguous) reshape: 3C decomposes as (3, n_head, hd). No transposes.
    qkv = qkv.reshape(B, T, 3, n_head, hd)

    y = pallas_flash_causal_attention(qkv, n_head=n_head,
                                      block_q=block_q, block_k=block_k)  # (B,T,C)
    y2d = y.reshape(B * T, C)                              # free reshape

    out = pallas_linear(y2d, params["w_proj"], params["b_proj"])
    return out.reshape(B, T, C)
    # TODO(synk): attn_dropout / resid_dropout omitted (eval mode, p = 0).


# ----------------------------------------------------------------------------
# Pure-JAX reference (for correctness check)
# ----------------------------------------------------------------------------
def reference(x, params, n_head):
    B, T, C = x.shape
    hd = C // n_head
    qkv = x @ params["w_attn"] + params["b_attn"]
    q, k, v = jnp.split(qkv, 3, axis=2)
    q = q.reshape(B, T, n_head, hd).transpose(0, 2, 1, 3)
    k = k.reshape(B, T, n_head, hd).transpose(0, 2, 1, 3)
    v = v.reshape(B, T, n_head, hd).transpose(0, 2, 1, 3)
    s = jnp.einsum("bhqd,bhkd->bhqk", q, k) / math.sqrt(hd)
    mask = jnp.tril(jnp.ones((T, T), dtype=bool))
    s = jnp.where(mask[None, None], s, -jnp.inf)
    p = jax.nn.softmax(s, axis=-1)
    y = jnp.einsum("bhqk,bhkd->bhqd", p, v)
    y = y.transpose(0, 2, 1, 3).reshape(B, T, C)
    return y @ params["w_proj"] + params["b_proj"]


if __name__ == "__main__":
    # Small config: n_embd=32, n_head=4, T=16, bias=True, dropout=0.
    B, T, C, n_head = 2, 16, 32, 4

    key = jax.random.PRNGKey(0)
    kx, k1, k2, k3, k4 = jax.random.split(key, 5)

    x = jax.random.normal(kx, (B, T, C), dtype=jnp.float32)

    # PyTorch Linear stores weight as (out, in); we store the (in, out) layout
    # used by x @ W.
    params = {
        "w_attn": jax.random.normal(k1, (C, 3 * C), dtype=jnp.float32) * 0.02,
        "b_attn": jax.random.normal(k2, (1, 3 * C), dtype=jnp.float32) * 0.02,
        "w_proj": jax.random.normal(k3, (C, C), dtype=jnp.float32) * 0.02,
        "b_proj": jax.random.normal(k4, (1, C), dtype=jnp.float32) * 0.02,
    }

    # block_q/block_k = 8 so the T=16 test exercises multiple KV blocks
    # (init / accumulate / causal block-skip + clamped K/V index / finalize),
    # not just one tile.  Production defaults are 256.
    out = causal_self_attention(x, params, n_head, block_q=8, block_k=8)
    out = jax.block_until_ready(out)

    ref = reference(x, params, n_head)
    assert out.shape == (B, T, C)
    assert jnp.allclose(out, ref, atol=1e-3, rtol=1e-3), "mismatch vs reference"

    print("KERNEL_OK")
</pallas_src>

<mosaic_0001>
module attributes {stable_mosaic.version = 11 : i64} {
  func.func @_linear_kernel(%arg0: i32, %arg1: i32, %arg2: i32, %arg3: memref<32x32xf32, #tpu.memory_space<vmem>>, %arg4: memref<32x96xf32, #tpu.memory_space<vmem>>, %arg5: memref<1x96xf32, #tpu.memory_space<vmem>>, %arg6: memref<32x96xf32, #tpu.memory_space<vmem>>, %arg7: memref<32x96xf32, #tpu.memory_space<vmem>>) attributes {dimension_semantics = [#tpu.dimension_semantics<parallel>, #tpu.dimension_semantics<parallel>, #tpu.dimension_semantics<arbitrary>], iteration_bounds = array<i64: 1, 1, 1>, scalar_prefetch = 0 : i64, scratch_operands = 1 : i64, tpu.core_type = #tpu.core_type<tc>, window_params = [{transform_indices = @transform_0, window_bounds = array<i64: 32, 32>}, {transform_indices = @transform_1, window_bounds = array<i64: 32, 96>}, {transform_indices = @transform_2, window_bounds = array<i64: 1, 96>}, {transform_indices = @transform_3, window_bounds = array<i64: 32, 96>}]} {
    %c0_i32 = arith.constant 0 : i32
    %0 = arith.cmpi eq, %arg2, %c0_i32 : i32
    %1 = arith.extui %0 : i1 to i32
    %c0_i32_0 = arith.constant 0 : i32
    %2 = arith.cmpi ne, %1, %c0_i32_0 : i32
    scf.if %2 {
      %cst_10 = arith.constant 0.000000e+00 : f32
      %12 = vector.broadcast %cst_10 : f32 to vector<32x96xf32>
      %c0_11 = arith.constant 0 : index
      %c0_12 = arith.constant 0 : index
      %13 = vector.load %arg7[%c0_11, %c0_12] : memref<32x96xf32, #tpu.memory_space<vmem>>, vector<32x96xf32>
      tpu.vector_store %arg7[%c0_11, %c0_12], %12 {strides = array<i32>} : memref<32x96xf32, #tpu.memory_space<vmem>>, vector<32x96xf32>,
    } else {
    }
    %c0 = arith.constant 0 : index
    %c0_1 = arith.constant 0 : index
    %3 = vector.load %arg7[%c0, %c0_1] : memref<32x96xf32, #tpu.memory_space<vmem>>, vector<32x96xf32>
    %c0_2 = arith.constant 0 : index
    %c0_3 = arith.constant 0 : index
    %4 = vector.load %arg3[%c0_2, %c0_3] : memref<32x32xf32, #tpu.memory_space<vmem>>, vector<32x32xf32>
    %c0_4 = arith.constant 0 : index
    %c0_5 = arith.constant 0 : index
    %5 = vector.load %arg4[%c0_4, %c0_5] : memref<32x96xf32, #tpu.memory_space<vmem>>, vector<32x96xf32>
    %cst = arith.constant dense<0.000000e+00> : vector<32x96xf32>
    %6 = tpu.matmul %4, %5, %cst {dimension_numbers = #tpu.dot_dimension_numbers<[1], [0], [0], [1], [0, 0, 1, 1], [], []>} : vector<32x32xf32>, vector<32x96xf32>, vector<32x96xf32> -> vector<32x96xf32>
    %7 = arith.addf %3, %6 : vector<32x96xf32>
    %c0_6 = arith.constant 0 : index
    %c0_7 = arith.constant 0 : index
    %8 = vector.load %arg7[%c0_6, %c0_7] : memref<32x96xf32, #tpu.memory_space<vmem>>, vector<32x96xf32>
    tpu.vector_store %arg7[%c0_6, %c0_7], %7 {strides = array<i32>} : memref<32x96xf32, #tpu.memory_space<vmem>>, vector<32x96xf32>,
    %c0_i32_8 = arith.constant 0 : i32
    %9 = arith.cmpi eq, %arg2, %c0_i32_8 : i32
    %10 = arith.extui %9 : i1 to i32
    %c0_i32_9 = arith.constant 0 : i32
    %11 = arith.cmpi ne, %10, %c0_i32_9 : i32
    scf.if %11 {
      %c0_10 = arith.constant 0 : index
      %c0_11 = arith.constant 0 : index
      %12 = vector.load %arg7[%c0_10, %c0_11] : memref<32x96xf32, #tpu.memory_space<vmem>>, vector<32x96xf32>
      %c0_12 = arith.constant 0 : index
      %c0_13 = arith.constant 0 : index
      %13 = vector.load %arg5[%c0_12, %c0_13] : memref<1x96xf32, #tpu.memory_space<vmem>>, vector<1x96xf32>
      %14 = vector.broadcast %13 : vector<1x96xf32> to vector<32x96xf32>
      %15 = arith.addf %12, %14 : vector<32x96xf32>
      %c0_14 = arith.constant 0 : index
      %c0_15 = arith.constant 0 : index
      %16 = vector.load %arg6[%c0_14, %c0_15] : memref<32x96xf32, #tpu.memory_space<vmem>>, vector<32x96xf32>
      tpu.vector_store %arg6[%c0_14, %c0_15], %15 {strides = array<i32>} : memref<32x96xf32, #tpu.memory_space<vmem>>, vector<32x96xf32>,
    } else {
    }
    return
  }
  func.func @transform_0(%arg0: i32, %arg1: i32, %arg2: i32) -> (i32, i32) {
    %c0_i32 = arith.constant 0 : i32
    return %arg0, %arg2 : i32, i32
  }
  func.func @transform_1(%arg0: i32, %arg1: i32, %arg2: i32) -> (i32, i32) {
    %c0_i32 = arith.constant 0 : i32
    return %arg2, %arg1 : i32, i32
  }
  func.func @transform_2(%arg0: i32, %arg1: i32, %arg2: i32) -> (i32, i32) {
    %c0_i32 = arith.constant 0 : i32
    %c0_i32_0 = arith.constant 0 : i32
    return %c0_i32, %arg1 : i32, i32
  }
  func.func @transform_3(%arg0: i32, %arg1: i32, %arg2: i32) -> (i32, i32) {
    %c0_i32 = arith.constant 0 : i32
    return %arg0, %arg1 : i32, i32
  }
}

</mosaic_0001>

<llo_original>
// kernel: tpu_custom_call.1
$region0: #{tpu_custom_call.1}
  #allocation0 [shape = 'u32[]', space=smem, size = 0x4, offset = 0x4, fixed_abs, tag = 'smem constant byte address 0x4 - core index']
  #allocation1 [shape = 'u32[144,128]{1,0:T(1,128)}', space=vmem, size = 0x12000, scoped, tag = 'internal scratch']
  #allocation2 [shape = 'f32[32,96]{1,0:T(8,128)}', space=vmem, size = 0x4000, scoped, tag = 'scratch operand']
  %s0 = inlined_call_operand.hbm [shape: f32[32,32], index: 0, kind: input, shape index: {}]
  %s1 = inlined_call_operand.hbm [shape: f32[32,96], index: 1, kind: input, shape index: {}]
  %s2 = inlined_call_operand.vmem [shape: f32[1,96], index: 2, kind: input, shape index: {}]
  %s3 = inlined_call_operand.hbm [shape: f32[32,96], index: 3, kind: output, shape index: {}]
  %s4 = sld [smem:[#allocation0]]
  $region38: #{tpu_custom_call.1} parent=0
    _
  %s6 = ssub.s32 1, %s4
  %s7 = scalar_select 0, %s6, %s4
  $region1: #{tpu_custom_call.1} parent=0
    #allocation3 [shape = 'u8[16384]{0}', space=vmem, size = 0x4000, scoped, tag = 'input window, operand 0, single buffered']
    #allocation4 [shape = 's32[1]{0}', space=sflag, size = 0x4, scoped, tag = 'scoped memory for tpu_custom_call.1']
    #allocation5 [shape = 's32[1]{0}', space=sflag, size = 0x4, scoped, tag = 'scoped memory for tpu_custom_call.1']
    #allocation6 [shape = 'u8[16384]{0}', space=vmem, size = 0x4000, scoped, tag = 'input window, operand 1, single buffered']
    #allocation7 [shape = 's32[1]{0}', space=sflag, size = 0x4, scoped, tag = 'scoped memory for tpu_custom_call.1']
    #allocation8 [shape = 'u8[16384]{0}', space=vmem, size = 0x4000, scoped, tag = 'output window, operand 0, single buffered']
    %8 = vsyncpa [#allocation4], 0
    %9 = vsyncpa [#allocation7], 0
    %10 = vsyncpa [#allocation5], 0
    // Predicated region
    $region2: #{tpu_custom_call.1} parent=1 // pred_check
      _
    $region3: #{tpu_custom_call.1} parent=1 // pred_check_branch
      %12 = sbr.rel (0) target = $region5
    $region4: #{tpu_custom_call.1} parent=1 // pred_region
      %s14 = ssub.s32 512, 512
      %15 = vsyncadd [#allocation4], %s14
      %s16 = sshll.u32 [#allocation3], 4
      %s17 = int_to_ptr.vmem [resolvable:$true] %s16
      %22 = dma.hbm_to_vmem [thread:$0]  %s0, 512, %s17, [#allocation4], 128, 128, 8
    $region5: #{tpu_custom_call.1} parent=1 // pred_fallthru
      _
    // Predicated region
    $region6: #{tpu_custom_call.1} parent=1 // pred_check
      _
    $region7: #{tpu_custom_call.1} parent=1 // pred_check_branch
      %24 = sbr.rel (0) target = $region9
    $region8: #{tpu_custom_call.1} parent=1 // pred_region
      %s26 = ssub.s32 512, 512
      %27 = vsyncadd [#allocation7], %s26
      %s28 = sshll.u32 [#allocation6], 4
      %s29 = int_to_ptr.vmem [resolvable:$true] %s28
      %34 = dma.hbm_to_vmem [thread:$0]  %s1, 512, %s29, [#allocation7], 128, 128, 8
    $region9: #{tpu_custom_call.1} parent=1 // pred_fallthru
      _
    // Predicated region
    $region10: #{tpu_custom_call.1} parent=1 // pred_check
      _
    $region11: #{tpu_custom_call.1} parent=1 // pred_check_branch
      %36 = sbr.rel (0) target = $region13
    $region12: #{tpu_custom_call.1} parent=1 // pred_region
      _
    $region13: #{tpu_custom_call.1} parent=1 // pred_fallthru
      _
    // Predicated region
    $region14: #{tpu_custom_call.1} parent=1 // pred_check
      _
    $region15: #{tpu_custom_call.1} parent=1 // pred_check_branch
      %38 = sbr.rel (0) target = $region17
    $region16: #{tpu_custom_call.1} parent=1 // pred_region
      %39 = dma.done [#allocation4], 512
    $region17: #{tpu_custom_call.1} parent=1 // pred_fallthru
      _
    // Predicated region
    $region18: #{tpu_custom_call.1} parent=1 // pred_check
      _
    $region19: #{tpu_custom_call.1} parent=1 // pred_check_branch
      %41 = sbr.rel (0) target = $region21
    $region20: #{tpu_custom_call.1} parent=1 // pred_region
      %42 = dma.done [#allocation7], 512
    $region21: #{tpu_custom_call.1} parent=1 // pred_fallthru
      _
    %p43 = scmp.eq.s32.totalorder 0, 0
    // Predicated region
    $region22: #{tpu_custom_call.1} parent=1 // pred_check
      %p44 = pneg %p43
    $region23: #{tpu_custom_call.1} parent=1 // pred_check_branch
      %46 = sbr.rel (%p44) target = $region25
    $region24: #{tpu_custom_call.1} parent=1 // pred_region
      %vm47 = vcmask 785408
      %48 = vst.msk [vmem:[#allocation2] sm:$0xff] %vm47, 0.0
      %49 = vst.msk [vmem:[#allocation2 + $0x8] sm:$0xff] %vm47, 0.0
      %50 = vst.msk [vmem:[#allocation2 + $0x10] sm:$0xff] %vm47, 0.0
      %51 = vst.msk [vmem:[#allocation2 + $0x18] sm:$0xff] %vm47, 0.0
    $region25: #{tpu_custom_call.1} parent=1 // pred_fallthru
      _
    %v52 = vld [vmem:[#allocation2] sm:$0xff]
    %v53 = vld [vmem:[#allocation2 + $0x8] sm:$0xff]
    %v54 = vld [vmem:[#allocation2 + $0x10] sm:$0xff]
    %v55 = vld [vmem:[#allocation2 + $0x18] sm:$0xff]
    %v56 = vld [vmem:[#allocation3] sm:$0xff]
    %v57 = vld [vmem:[#allocation3 + $0x8] sm:$0xff]
    %v58 = vld [vmem:[#allocation3 + $0x10] sm:$0xff]
    %v59 = vld [vmem:[#allocation3 + $0x18] sm:$0xff]
    %v60 = vld [vmem:[#allocation6] sm:$0xff]
    %v61 = vld [vmem:[#allocation6 + $0x8] sm:$0xff]
    %v62 = vld [vmem:[#allocation6 + $0x10] sm:$0xff]
    %v63 = vld [vmem:[#allocation6 + $0x18] sm:$0xff]
    %vm64 = vcmask 261120
    %v66 = vsel %vm64, %v56, 0
    %v69 = vsel %vm64, %v57, 0
    %v72 = vsel %vm64, %v58, 0
    %v75 = vsel %vm64, %v59, 0
    %77 = vmatprep.subr.mxu0 0.0
    %78 = vmatpush1.msra.mxu0 %v60
    %79 = vmatprep.subr.mxu0 0.0
    %80 = vmatpush1.msra.mxu0 %v61
    %81 = vmatprep.subr.mxu0 0.0
    %82 = vmatpush1.msra.mxu0 %v62
    %83 = vmatprep.subr.mxu0 0.0
    %84 = vmatpush1.msra.mxu0 %v63
    %85 = vmatprep.subr.mxu0 0.0
    %86 = vmatpush1.msra.mxu0 0.0
    %87 = vmatprep.subr.mxu0 0.0
    %88 = vmatpush1.msra.mxu0 0.0
    %89 = vmatprep.subr.mxu0 0.0
    %90 = vmatpush1.msra.mxu0 0.0
    %91 = vmatprep.subr.mxu0 0.0
    %92 = vmatpush1.msra.mxu0 0.0
    %93 = vmatprep.subr.mxu0 0.0
    %94 = vmatpush1.msra.mxu0 0.0
    %95 = vmatprep.subr.mxu0 0.0
    %96 = vmatpush1.msra.mxu0 0.0
    %97 = vmatprep.subr.mxu0 0.0
    %98 = vmatpush1.msra.mxu0 0.0
    %99 = vmatprep.subr.mxu0 0.0
    %100 = vmatpush1.msra.mxu0 0.0
    %101 = vmatprep.subr.mxu0 0.0
    %102 = vmatpush1.msra.mxu0 0.0
    %103 = vmatprep.subr.mxu0 0.0
    %104 = vmatpush1.msra.mxu0 0.0
    %105 = vmatprep.subr.mxu0 0.0
    %106 = vmatpush1.msra.mxu0 0.0
    %107 = vmatprep.subr.mxu0 0.0
    %108 = vmatpush1.msra.mxu0 0.0
    %109 = vmatprep.subr.mxu0 0.0
    %110 = vmatpush1.msra.mxu0 0.0
    %111 = vmatprep.subr.mxu0 0.0
    %112 = vmatpush1.msra.mxu0 0.0
    %113 = vmatprep.subr.mxu0 0.0
    %114 = vmatpush1.msra.mxu0 0.0
    %115 = vmatprep.subr.mxu0 0.0
    %116 = vmatpush1.msra.mxu0 0.0
    %117 = vmatprep.subr.mxu0 0.0
    %118 = vmatpush1.msra.mxu0 0.0
    %119 = vmatprep.subr.mxu0 0.0
    %120 = vmatpush1.msra.mxu0 0.0
    %121 = vmatprep.subr.mxu0 0.0
    %122 = vmatpush1.msra.mxu0 0.0
    %123 = vmatprep.subr.mxu0 0.0
    %124 = vmatpush1.msra.mxu0 0.0
    %125 = vmatprep.subr.mxu0 0.0
    %126 = vmatpush1.msra.mxu0 0.0
    %127 = vmatprep.subr.mxu0 0.0
    %128 = vmatpush1.msra.mxu0 0.0
    %129 = vmatprep.subr.mxu0 0.0
    %130 = vmatpush1.msra.mxu0 0.0
    %131 = vmatprep.subr.mxu0 0.0
    %132 = vmatpush1.msra.mxu0 0.0
    %133 = vmatprep.subr.mxu0 0.0
    %134 = vmatpush1.msra.mxu0 0.0
    %135 = vmatprep.subr.mxu0 0.0
    %136 = vmatpush1.msra.mxu0 0.0
    %137 = vmatprep.subr.mxu0 0.0
    %138 = vmatpush1.msra.mxu0 0.0
    %139 = vmatprep.subr.mxu0 0.0
    %140 = vmatpush1.msra.mxu0 0.0
    %141 = vmatprep.mubr.f32.mxu0 0.0
    %142 = vmatmul.mubr.f32.gmra.mrb[0].mxu0 %v66
    %v143 = vpop.f32.mrb[0].mxu0
    %v144 = vadd.f32 0.0, %v143
    %v145 = vpop.f32.mrb[0].mxu0
    %146 = vmatprep.mubr.f32.mxu0 0.0
    %147 = vmatmul.mubr.f32.gmra.mrb[0].mxu0 %v69
    %v148 = vpop.f32.mrb[0].mxu0
    %v149 = vadd.f32 0.0, %v148
    %v150 = vpop.f32.mrb[0].mxu0
    %151 = vmatprep.mubr.f32.mxu0 0.0
    %152 = vmatmul.mubr.f32.gmra.mrb[0].mxu0 %v72
    %v153 = vpop.f32.mrb[0].mxu0
    %v154 = vadd.f32 0.0, %v153
    %v155 = vpop.f32.mrb[0].mxu0
    %156 = vmatprep.mubr.f32.mxu0 0.0
    %157 = vmatmul.mubr.f32.gmra.mrb[0].mxu0 %v75
    %v158 = vpop.f32.mrb[0].mxu0
    %v159 = vadd.f32 0.0, %v158
    %v160 = vpop.f32.mrb[0].mxu0
    %161 = vdwg.mxu0
    %v162 = vadd.f32 %v52, %v144
    %v163 = vadd.f32 %v53, %v149
    %v164 = vadd.f32 %v54, %v154
    %v165 = vadd.f32 %v55, %v159
    %vm166 = vcmask 785408
    %167 = vst.msk [vmem:[#allocation2] sm:$0xff] %vm166, %v162
    %168 = vst.msk [vmem:[#allocation2 + $0x8] sm:$0xff] %vm166, %v163
    %169 = vst.msk [vmem:[#allocation2 + $0x10] sm:$0xff] %vm166, %v164
    %170 = vst.msk [vmem:[#allocation2 + $0x18] sm:$0xff] %vm166, %v165
    // Predicated region
    $region26: #{tpu_custom_call.1} parent=1 // pred_check
      %p171 = pneg %p43
    $region27: #{tpu_custom_call.1} parent=1 // pred_check_branch
      %173 = sbr.rel (%p171) target = $region29
    $region28: #{tpu_custom_call.1} parent=1 // pred_region
      %v174 = vld [vmem:[#allocation2] sm:$0xff]
      %v175 = vld [vmem:[#allocation2 + $0x8] sm:$0xff]
      %v176 = vld [vmem:[#allocation2 + $0x10] sm:$0xff]
      %v177 = vld [vmem:[#allocation2 + $0x18] sm:$0xff]
      %v178 = vld [vmem:[%s2] sm:$0x1]
      %v180 = vlaneseq
      %v181 = vshrl.u32 %v180, 7
      %v182 = vsub.s32 0, %v181
      %v183 = vrot.slane %v178, %v182
      %v185 = vadd.f32 %v174, %v183
      %v186 = vadd.f32 %v175, %v183
      %v187 = vadd.f32 %v176, %v183
      %v188 = vadd.f32 %v177, %v183
      %189 = vst.msk [vmem:[#allocation8] sm:$0xff] %vm166, %v185
      %190 = vst.msk [vmem:[#allocation8 + $0x8] sm:$0xff] %vm166, %v186
      %191 = vst.msk [vmem:[#allocation8 + $0x10] sm:$0xff] %vm166, %v187
      %192 = vst.msk [vmem:[#allocation8 + $0x18] sm:$0xff] %vm166, %v188
    $region29: #{tpu_custom_call.1} parent=1 // pred_fallthru
      _
    // Predicated region
    $region30: #{tpu_custom_call.1} parent=1 // pred_check
      _
    $region31: #{tpu_custom_call.1} parent=1 // pred_check_branch
      %194 = sbr.rel (0) target = $region33
    $region32: #{tpu_custom_call.1} parent=1 // pred_region
      %s196 = ssub.s32 512, 512
      %197 = vsyncadd [#allocation5], %s196
      %s198 = sshll.u32 [#allocation8], 4
      %s199 = int_to_ptr.vmem [resolvable:$true] %s198
      %204 = dma.vmem_to_hbm [thread:$0]  %s199, 512, %s3, [#allocation5], 128, 128, 8
    $region33: #{tpu_custom_call.1} parent=1 // pred_fallthru
      _
    // Predicated region
    $region34: #{tpu_custom_call.1} parent=1 // pred_check
      _
    $region35: #{tpu_custom_call.1} parent=1 // pred_check_branch
      %206 = sbr.rel (0) target = $region37
    $region36: #{tpu_custom_call.1} parent=1 // pred_region
      %207 = dma.done [#allocation5], 512
    $region37: #{tpu_custom_call.1} parent=1 // pred_fallthru
      _
    %208 = vsyncpa [#allocation4], 1
    %209 = vsyncpa [#allocation7], 1
    %210 = vsyncpa [#allocation5], 1

</llo_original>
